<compile_context>
chip_gen: v5e
topology: v5e:2x2
jax: 0.10.0
libtpu: 0.0.40
codegen_flags: <defaults>
</compile_context>

<pallas_src>
import jax
import jax.numpy as jnp
from jax import lax
from jax.experimental import pallas as pl
from jax.experimental.pallas import tpu as pltpu


def _round_up(x, m):
    return ((x + m - 1) // m) * m


def _mlp_kernel(x_ref, w1_ref, w3_ref, w2_ref, o_ref, acc_ref):
    # x_ref  : (tm, dim)  bf16  activation row tile
    # w1_ref : (tn, dim)  bf16  gate projection slice   ([out, in] layout)
    # w3_ref : (tn, dim)  bf16  up   projection slice
    # w2_ref : (dim, tn)  bf16  down projection slice
    # o_ref  : (tm, dim)  output tile (written on last hidden step)
    # acc_ref: (tm, dim)  f32 accumulator, resident across the hidden axis
    j = pl.program_id(1)

    @pl.when(j == 0)
    def _():
        acc_ref[...] = jnp.zeros_like(acc_ref)

    x = x_ref[...]
    # Contract on the last axis of both operands -> keeps nn.Linear layout.
    dn = (((1,), (1,)), ((), ()))
    h1 = lax.dot_general(x, w1_ref[...], dn, preferred_element_type=jnp.float32)
    h3 = lax.dot_general(x, w3_ref[...], dn, preferred_element_type=jnp.float32)
    # SiLU gate in f32 (VPU elementwise + EUP sigmoid), cast just before MXU.
    g = (h1 * jax.nn.sigmoid(h1)) * h3
    acc_ref[...] += lax.dot_general(
        g.astype(jnp.bfloat16), w2_ref[...], dn,
        preferred_element_type=jnp.float32)

    @pl.when(j == pl.num_programs(1) - 1)
    def _():
        o_ref[...] = acc_ref[...].astype(o_ref.dtype)


# Steady-state VMEM budget: safe on v7x (64 MiB physical) and leaves plenty of
# headroom on v5e/v6e while still feeding the MXU with large tiles.
_VMEM_BUDGET = 40 * 1024 * 1024


def _pick_tiles(M, dim, hidden, out_bytes, tm_req, tn_req):
    """Pick (tm, tn) tiles that satisfy bf16 tiling constraints and the VMEM budget."""
    tm = _round_up(min(tm_req, _round_up(M, 16)), 16)       # bf16 sublane = 16
    tn = _round_up(min(tn_req, _round_up(hidden, 128)), 128)  # lane = 128

    def vmem_bytes(tm_, tn_):
        in_b = 2                                  # bf16 operands
        w_tiles = 3 * tn_ * dim * in_b            # w1, w3 (tn,dim) + w2 (dim,tn)
        x_tile = tm_ * dim * in_b
        o_tile = tm_ * dim * out_bytes
        acc = tm_ * dim * 4
        interm = 3 * tm_ * tn_ * 4                # h1, h3, g f32 intermediates
        return 2 * (w_tiles + x_tile + o_tile) + acc + interm

    while vmem_bytes(tm, tn) > _VMEM_BUDGET and tn > 128:
        tn = max(128, tn // 2)
    while vmem_bytes(tm, tn) > _VMEM_BUDGET and tm > 16:
        tm = max(16, tm // 2)
    return tm, tn, vmem_bytes(tm, tn)


def llama_mlp(x, w1, w2, w3, *, tm=256, tn=2048):
    """SwiGLU MLP: w2( silu(w1(x)) * w3(x) ).

    x : [batch, seq, dim]
    w1: [hidden, dim], w3: [hidden, dim], w2: [dim, hidden]   (nn.Linear layout)
    Returns [batch, seq, dim] in x.dtype.
    """
    batch, seq, dim = x.shape
    hidden = w1.shape[0]
    M = batch * seq
    out_dtype = x.dtype
    out_bytes = jnp.dtype(out_dtype).itemsize

    tm_eff, tn_eff, vmem_need = _pick_tiles(M, dim, hidden, out_bytes, tm, tn)

    # bf16 matmul operands (f32 accumulation inside the kernel).  In a real
    # deployment the weights are stored in bf16 already, making these no-ops.
    cdt = jnp.bfloat16
    x2d = x.reshape(M, dim).astype(cdt)
    w1b = w1.astype(cdt)
    w3b = w3.astype(cdt)
    w2b = w2.astype(cdt)

    # Pad rows / hidden so the grid divides evenly (no hard assert).  The
    # zero-padded hidden columns of w2 kill any padded-slice contribution.
    M_pad = _round_up(M, tm_eff)
    H_pad = _round_up(hidden, tn_eff)
    if M_pad != M:
        x2d = jnp.pad(x2d, ((0, M_pad - M), (0, 0)))
    if H_pad != hidden:
        hp = H_pad - hidden
        w1b = jnp.pad(w1b, ((0, hp), (0, 0)))
        w3b = jnp.pad(w3b, ((0, hp), (0, 0)))
        w2b = jnp.pad(w2b, ((0, 0), (0, hp)))

    grid = (M_pad // tm_eff, H_pad // tn_eff)

    out2d = pl.pallas_call(
        _mlp_kernel,
        out_shape=jax.ShapeDtypeStruct((M_pad, dim), out_dtype),
        grid_spec=pltpu.PrefetchScalarGridSpec(
            num_scalar_prefetch=0,
            grid=grid,
            in_specs=[
                pl.BlockSpec((tm_eff, dim), lambda i, j: (i, 0)),   # x rows
                pl.BlockSpec((tn_eff, dim), lambda i, j: (j, 0)),   # w1 hidden slice
                pl.BlockSpec((tn_eff, dim), lambda i, j: (j, 0)),   # w3 hidden slice
                pl.BlockSpec((dim, tn_eff), lambda i, j: (0, j)),   # w2 hidden slice
            ],
            out_specs=pl.BlockSpec((tm_eff, dim), lambda i, j: (i, 0)),
            scratch_shapes=[pltpu.VMEM((tm_eff, dim), jnp.float32)],
        ),
        compiler_params=pltpu.CompilerParams(
            dimension_semantics=("parallel", "arbitrary"),
            vmem_limit_bytes=min(
                max(int(vmem_need * 1.25) + (4 << 20), 32 << 20), 56 << 20),
        ),
    )(x2d, w1b, w3b, w2b)

    return out2d[:M].reshape(batch, seq, dim)


def llama_mlp_ref(x, w1, w2, w3):
    """Pure-JAX reference matching the kernel's bf16-matmul / f32-accumulate path."""
    b = jnp.bfloat16
    h1 = jnp.einsum("bsd,hd->bsh", x.astype(b), w1.astype(b),
                    preferred_element_type=jnp.float32)
    h3 = jnp.einsum("bsd,hd->bsh", x.astype(b), w3.astype(b),
                    preferred_element_type=jnp.float32)
    g = (h1 * jax.nn.sigmoid(h1)) * h3
    out = jnp.einsum("bsh,dh->bsd", g.astype(b), w2.astype(b),
                     preferred_element_type=jnp.float32)
    return out.astype(x.dtype)


if __name__ == "__main__":
    # Small, TPU-friendly shapes consistent with the Llama MLP structure.
    batch, seq, dim, hidden = 2, 8, 128, 256

    key = jax.random.PRNGKey(0)
    kx, k1, k2, k3 = jax.random.split(key, 4)
    x = jax.random.normal(kx, (batch, seq, dim), dtype=jnp.float32)
    # nn.Linear weight layout: [out_features, in_features]
    w1 = jax.random.normal(k1, (hidden, dim), dtype=jnp.float32) * 0.02
    w2 = jax.random.normal(k2, (dim, hidden), dtype=jnp.float32) * 0.02
    w3 = jax.random.normal(k3, (hidden, dim), dtype=jnp.float32) * 0.02

    out = llama_mlp(x, w1, w2, w3)
    jax.block_until_ready(out)

    ref = llama_mlp_ref(x, w1, w2, w3)
    assert out.shape == (batch, seq, dim)
    max_err = float(jnp.max(jnp.abs(out - ref)))
    assert jnp.allclose(out, ref, atol=2e-2, rtol=2e-2), (
        f"mismatch vs JAX reference (max |err| = {max_err})")

    print("KERNEL_OK")
</pallas_src>

<mosaic_0001>
module attributes {stable_mosaic.version = 11 : i64} {
  func.func @_mlp_kernel(%arg0: i32, %arg1: i32, %arg2: memref<16x128xbf16, #tpu.memory_space<vmem>>, %arg3: memref<256x128xbf16, #tpu.memory_space<vmem>>, %arg4: memref<256x128xbf16, #tpu.memory_space<vmem>>, %arg5: memref<128x256xbf16, #tpu.memory_space<vmem>>, %arg6: memref<16x128xf32, #tpu.memory_space<vmem>>, %arg7: memref<16x128xf32, #tpu.memory_space<vmem>>) attributes {dimension_semantics = [#tpu.dimension_semantics<parallel>, #tpu.dimension_semantics<arbitrary>], iteration_bounds = array<i64: 1, 1>, scalar_prefetch = 0 : i64, scratch_operands = 1 : i64, tpu.core_type = #tpu.core_type<tc>, window_params = [{transform_indices = @transform_0, window_bounds = array<i64: 16, 128>}, {transform_indices = @transform_1, window_bounds = array<i64: 256, 128>}, {transform_indices = @transform_2, window_bounds = array<i64: 256, 128>}, {transform_indices = @transform_3, window_bounds = array<i64: 128, 256>}, {transform_indices = @transform_4, window_bounds = array<i64: 16, 128>}]} {
    %c0_i32 = arith.constant 0 : i32
    %0 = arith.cmpi eq, %arg1, %c0_i32 : i32
    %1 = arith.extui %0 : i1 to i32
    %c0_i32_0 = arith.constant 0 : i32
    %2 = arith.cmpi ne, %1, %c0_i32_0 : i32
    scf.if %2 {
      %cst_17 = arith.constant 0.000000e+00 : f32
      %24 = vector.broadcast %cst_17 : f32 to vector<16x128xf32>
      %c0_18 = arith.constant 0 : index
      %c0_19 = arith.constant 0 : index
      %25 = vector.load %arg7[%c0_18, %c0_19] : memref<16x128xf32, #tpu.memory_space<vmem>>, vector<16x128xf32>
      tpu.vector_store %arg7[%c0_18, %c0_19], %24 {strides = array<i32>} : memref<16x128xf32, #tpu.memory_space<vmem>>, vector<16x128xf32>,
    } else {
    }
    %c0 = arith.constant 0 : index
    %c0_1 = arith.constant 0 : index
    %3 = vector.load %arg2[%c0, %c0_1] : memref<16x128xbf16, #tpu.memory_space<vmem>>, vector<16x128xbf16>
    %c0_2 = arith.constant 0 : index
    %c0_3 = arith.constant 0 : index
    %4 = vector.load %arg3[%c0_2, %c0_3] : memref<256x128xbf16, #tpu.memory_space<vmem>>, vector<256x128xbf16>
    %cst = arith.constant dense<0.000000e+00> : vector<16x256xf32>
    %5 = tpu.matmul %3, %4, %cst {dimension_numbers = #tpu.dot_dimension_numbers<[1], [1], [0], [0], [0, 0, 1, 0], [], []>} : vector<16x128xbf16>, vector<256x128xbf16>, vector<16x256xf32> -> vector<16x256xf32>
    %c0_4 = arith.constant 0 : index
    %c0_5 = arith.constant 0 : index
    %6 = vector.load %arg4[%c0_4, %c0_5] : memref<256x128xbf16, #tpu.memory_space<vmem>>, vector<256x128xbf16>
    %cst_6 = arith.constant dense<0.000000e+00> : vector<16x256xf32>
    %7 = tpu.matmul %3, %6, %cst_6 {dimension_numbers = #tpu.dot_dimension_numbers<[1], [1], [0], [0], [0, 0, 1, 0], [], []>} : vector<16x128xbf16>, vector<256x128xbf16>, vector<16x256xf32> -> vector<16x256xf32>
    %8 = arith.negf %5 : vector<16x256xf32>
    %9 = math.exp %8 : vector<16x256xf32>
    %cst_7 = arith.constant 1.000000e+00 : f32
    %10 = vector.broadcast %cst_7 : f32 to vector<16x256xf32>
    %11 = arith.addf %10, %9 : vector<16x256xf32>
    %12 = arith.divf %10, %11 : vector<16x256xf32>
    %13 = arith.mulf %5, %12 : vector<16x256xf32>
    %14 = arith.mulf %13, %7 : vector<16x256xf32>
    %c0_8 = arith.constant 0 : index
    %c0_9 = arith.constant 0 : index
    %15 = vector.load %arg7[%c0_8, %c0_9] : memref<16x128xf32, #tpu.memory_space<vmem>>, vector<16x128xf32>
    %16 = arith.truncf %14 : vector<16x256xf32> to vector<16x256xbf16>
    %c0_10 = arith.constant 0 : index
    %c0_11 = arith.constant 0 : index
    %17 = vector.load %arg5[%c0_10, %c0_11] : memref<128x256xbf16, #tpu.memory_space<vmem>>, vector<128x256xbf16>
    %cst_12 = arith.constant dense<0.000000e+00> : vector<16x128xf32>
    %18 = tpu.matmul %16, %17, %cst_12 {dimension_numbers = #tpu.dot_dimension_numbers<[1], [1], [0], [0], [0, 0, 1, 0], [], []>} : vector<16x256xbf16>, vector<128x256xbf16>, vector<16x128xf32> -> vector<16x128xf32>
    %19 = arith.addf %15, %18 : vector<16x128xf32>
    %c0_13 = arith.constant 0 : index
    %c0_14 = arith.constant 0 : index
    %20 = vector.load %arg7[%c0_13, %c0_14] : memref<16x128xf32, #tpu.memory_space<vmem>>, vector<16x128xf32>
    tpu.vector_store %arg7[%c0_13, %c0_14], %19 {strides = array<i32>} : memref<16x128xf32, #tpu.memory_space<vmem>>, vector<16x128xf32>,
    %c0_i32_15 = arith.constant 0 : i32
    %21 = arith.cmpi eq, %arg1, %c0_i32_15 : i32
    %22 = arith.extui %21 : i1 to i32
    %c0_i32_16 = arith.constant 0 : i32
    %23 = arith.cmpi ne, %22, %c0_i32_16 : i32
    scf.if %23 {
      %c0_17 = arith.constant 0 : index
      %c0_18 = arith.constant 0 : index
      %24 = vector.load %arg7[%c0_17, %c0_18] : memref<16x128xf32, #tpu.memory_space<vmem>>, vector<16x128xf32>
      %c0_19 = arith.constant 0 : index
      %c0_20 = arith.constant 0 : index
      %25 = vector.load %arg6[%c0_19, %c0_20] : memref<16x128xf32, #tpu.memory_space<vmem>>, vector<16x128xf32>
      tpu.vector_store %arg6[%c0_19, %c0_20], %24 {strides = array<i32>} : memref<16x128xf32, #tpu.memory_space<vmem>>, vector<16x128xf32>,
    } else {
    }
    return
  }
  func.func @transform_0(%arg0: i32, %arg1: i32) -> (i32, i32) {
    %c0_i32 = arith.constant 0 : i32
    %c0_i32_0 = arith.constant 0 : i32
    return %arg0, %c0_i32 : i32, i32
  }
  func.func @transform_1(%arg0: i32, %arg1: i32) -> (i32, i32) {
    %c0_i32 = arith.constant 0 : i32
    %c0_i32_0 = arith.constant 0 : i32
    return %arg1, %c0_i32 : i32, i32
  }
  func.func @transform_2(%arg0: i32, %arg1: i32) -> (i32, i32) {
    %c0_i32 = arith.constant 0 : i32
    %c0_i32_0 = arith.constant 0 : i32
    return %arg1, %c0_i32 : i32, i32
  }
  func.func @transform_3(%arg0: i32, %arg1: i32) -> (i32, i32) {
    %c0_i32 = arith.constant 0 : i32
    %c0_i32_0 = arith.constant 0 : i32
    return %c0_i32, %arg1 : i32, i32
  }
  func.func @transform_4(%arg0: i32, %arg1: i32) -> (i32, i32) {
    %c0_i32 = arith.constant 0 : i32
    %c0_i32_0 = arith.constant 0 : i32
    return %arg0, %c0_i32 : i32, i32
  }
}

</mosaic_0001>

<llo_original>
// kernel: tpu_custom_call.1
$region0: #{tpu_custom_call.1}
  #allocation0 [shape = 'u32[]', space=smem, size = 0x4, offset = 0x4, fixed_abs, tag = 'smem constant byte address 0x4 - core index']
  #allocation1 [shape = 'u32[72,128]{1,0:T(1,128)}', space=vmem, size = 0x9000, scoped, tag = 'internal scratch']
  #allocation2 [shape = 'f32[16,128]{1,0:T(8,128)}', space=vmem, size = 0x2000, scoped, tag = 'scratch operand']
  %s0 = inlined_call_operand.hbm [shape: bf16[16,128], index: 0, kind: input, shape index: {}]
  %s1 = inlined_call_operand.hbm [shape: bf16[256,128], index: 1, kind: input, shape index: {}]
  %s2 = inlined_call_operand.hbm [shape: bf16[256,128], index: 2, kind: input, shape index: {}]
  %s3 = inlined_call_operand.hbm [shape: bf16[128,256], index: 3, kind: input, shape index: {}]
  %s4 = inlined_call_operand.hbm [shape: f32[16,128], index: 4, kind: output, shape index: {}]
  %s5 = sld [smem:[#allocation0]]
  $region50: #{tpu_custom_call.1} parent=0
    _
  %s7 = ssub.s32 1, %s5
  %s8 = scalar_select 0, %s7, %s5
  $region1: #{tpu_custom_call.1} parent=0
    #allocation3 [shape = 'u8[4096]{0}', space=vmem, size = 0x1000, scoped, tag = 'input window, operand 0, single buffered']
    #allocation4 [shape = 's32[1]{0}', space=sflag, size = 0x4, scoped, tag = 'scoped memory for tpu_custom_call.1']
    #allocation5 [shape = 's32[1]{0}', space=sflag, size = 0x4, scoped, tag = 'scoped memory for tpu_custom_call.1']
    #allocation6 [shape = 'u8[65536]{0}', space=vmem, size = 0x10000, scoped, tag = 'input window, operand 1, single buffered']
    #allocation7 [shape = 's32[1]{0}', space=sflag, size = 0x4, scoped, tag = 'scoped memory for tpu_custom_call.1']
    #allocation8 [shape = 'u8[65536]{0}', space=vmem, size = 0x10000, scoped, tag = 'input window, operand 2, single buffered']
    #allocation9 [shape = 'u8[65536]{0}', space=vmem, size = 0x10000, scoped, tag = 'input window, operand 3, single buffered']
    #allocation10 [shape = 's32[1]{0}', space=sflag, size = 0x4, scoped, tag = 'scoped memory for tpu_custom_call.1']
    #allocation11 [shape = 'u8[8192]{0}', space=vmem, size = 0x2000, scoped, tag = 'output window, operand 0, single buffered']
    %9 = vsyncpa [#allocation4], 0
    %10 = vsyncpa [#allocation7], 0
    %11 = vsyncpa [#allocation10], 0
    %12 = vsyncpa [#allocation5], 0
    // Predicated region
    $region2: #{tpu_custom_call.1} parent=1 // pred_check
      _
    $region3: #{tpu_custom_call.1} parent=1 // pred_check_branch
      %14 = sbr.rel (0) target = $region5
    $region4: #{tpu_custom_call.1} parent=1 // pred_region
      %16 = vsyncadd [#allocation4], 0
      %s17 = sshll.u32 %s0, 4
      %s18 = int_to_ptr.hbm [resolvable:$true] %s17
      %s19 = sshll.u32 [#allocation3], 4
      %s20 = int_to_ptr.vmem [resolvable:$true] %s19
      %25 = dma.hbm_to_vmem [thread:$0]  %s18, 128, %s20, [#allocation4], 64, 64, 4
    $region5: #{tpu_custom_call.1} parent=1 // pred_fallthru
      _
    // Predicated region
    $region6: #{tpu_custom_call.1} parent=1 // pred_check
      _
    $region7: #{tpu_custom_call.1} parent=1 // pred_check_branch
      %27 = sbr.rel (0) target = $region9
    $region8: #{tpu_custom_call.1} parent=1 // pred_region
      %29 = vsyncadd [#allocation7], 0
      %s30 = sshll.u32 %s1, 4
      %s31 = int_to_ptr.hbm [resolvable:$true] %s30
      %s32 = sshll.u32 [#allocation6], 4
      %s33 = int_to_ptr.vmem [resolvable:$true] %s32
      %38 = dma.hbm_to_vmem [thread:$0]  %s31, 2048, %s33, [#allocation7], 64, 64, 4
    $region9: #{tpu_custom_call.1} parent=1 // pred_fallthru
      _
    // Predicated region
    $region10: #{tpu_custom_call.1} parent=1 // pred_check
      _
    $region11: #{tpu_custom_call.1} parent=1 // pred_check_branch
      %40 = sbr.rel (0) target = $region13
    $region12: #{tpu_custom_call.1} parent=1 // pred_region
      %42 = vsyncadd [#allocation7], 0
      %s43 = sshll.u32 %s2, 4
      %s44 = int_to_ptr.hbm [resolvable:$true] %s43
      %s45 = sshll.u32 [#allocation8], 4
      %s46 = int_to_ptr.vmem [resolvable:$true] %s45
      %51 = dma.hbm_to_vmem [thread:$0]  %s44, 2048, %s46, [#allocation7], 64, 64, 4
    $region13: #{tpu_custom_call.1} parent=1 // pred_fallthru
      _
    // Predicated region
    $region14: #{tpu_custom_call.1} parent=1 // pred_check
      _
    $region15: #{tpu_custom_call.1} parent=1 // pred_check_branch
      %53 = sbr.rel (0) target = $region17
    $region16: #{tpu_custom_call.1} parent=1 // pred_region
      %55 = vsyncadd [#allocation10], 0
      %s56 = sshll.u32 %s3, 4
      %s57 = int_to_ptr.hbm [resolvable:$true] %s56
      %s58 = sshll.u32 [#allocation9], 4
      %s59 = int_to_ptr.vmem [resolvable:$true] %s58
      %64 = dma.hbm_to_vmem [thread:$0]  %s57, 2048, %s59, [#allocation10], 128, 128, 8
    $region17: #{tpu_custom_call.1} parent=1 // pred_fallthru
      _
    // Predicated region
    $region18: #{tpu_custom_call.1} parent=1 // pred_check
      _
    $region19: #{tpu_custom_call.1} parent=1 // pred_check_branch
      %66 = sbr.rel (0) target = $region21
    $region20: #{tpu_custom_call.1} parent=1 // pred_region
      %68 = dma.done [#allocation4], 128
    $region21: #{tpu_custom_call.1} parent=1 // pred_fallthru
      _
    // Predicated region
    $region22: #{tpu_custom_call.1} parent=1 // pred_check
      _
    $region23: #{tpu_custom_call.1} parent=1 // pred_check_branch
      %70 = sbr.rel (0) target = $region25
    $region24: #{tpu_custom_call.1} parent=1 // pred_region
      %72 = dma.done [#allocation7], 2048
    $region25: #{tpu_custom_call.1} parent=1 // pred_fallthru
      _
    // Predicated region
    $region26: #{tpu_custom_call.1} parent=1 // pred_check
      _
    $region27: #{tpu_custom_call.1} parent=1 // pred_check_branch
      %74 = sbr.rel (0) target = $region29
    $region28: #{tpu_custom_call.1} parent=1 // pred_region
      %76 = dma.done [#allocation7], 2048
    $region29: #{tpu_custom_call.1} parent=1 // pred_fallthru
      _
    // Predicated region
    $region30: #{tpu_custom_call.1} parent=1 // pred_check
      _
    $region31: #{tpu_custom_call.1} parent=1 // pred_check_branch
      %78 = sbr.rel (0) target = $region33
    $region32: #{tpu_custom_call.1} parent=1 // pred_region
      %80 = dma.done [#allocation10], 2048
    $region33: #{tpu_custom_call.1} parent=1 // pred_fallthru
      _
    %p81 = scmp.eq.s32.totalorder 0, 0
    // Predicated region
    $region34: #{tpu_custom_call.1} parent=1 // pred_check
      %p82 = pneg %p81
    $region35: #{tpu_custom_call.1} parent=1 // pred_check_branch
      %84 = sbr.rel (%p82) target = $region37
    $region36: #{tpu_custom_call.1} parent=1 // pred_region
      %85 = vst [vmem:[#allocation2] sm:$0xff] 0.0
      %86 = vst [vmem:[#allocation2 + $0x8] sm:$0xff] 0.0
    $region37: #{tpu_custom_call.1} parent=1 // pred_fallthru
      _
    %v87 = vld [vmem:[#allocation3] sm:$0xf]
    %v88 = vld [vmem:[#allocation3 + $0x4] sm:$0xf]
    %v89 = vld [vmem:[#allocation6] sm:$0xf]
    %v90 = vld [vmem:[#allocation6 + $0x4] sm:$0xf]
    %v91 = vld [vmem:[#allocation6 + $0x8] sm:$0xf]
    %v92 = vld [vmem:[#allocation6 + $0xc] sm:$0xf]
    %v93 = vld [vmem:[#allocation6 + $0x10] sm:$0xf]
    %v94 = vld [vmem:[#allocation6 + $0x14] sm:$0xf]
    %v95 = vld [vmem:[#allocation6 + $0x18] sm:$0xf]
    %v96 = vld [vmem:[#allocation6 + $0x1c] sm:$0xf]
    %v97 = vld [vmem:[#allocation6 + $0x20] sm:$0xf]
    %v98 = vld [vmem:[#allocation6 + $0x24] sm:$0xf]
    %v99 = vld [vmem:[#allocation6 + $0x28] sm:$0xf]
    %v100 = vld [vmem:[#allocation6 + $0x2c] sm:$0xf]
    %v101 = vld [vmem:[#allocation6 + $0x30] sm:$0xf]
    %v102 = vld [vmem:[#allocation6 + $0x34] sm:$0xf]
    %v103 = vld [vmem:[#allocation6 + $0x38] sm:$0xf]
    %v104 = vld [vmem:[#allocation6 + $0x3c] sm:$0xf]
    %v105 = vld [vmem:[#allocation6 + $0x40] sm:$0xf]
    %v106 = vld [vmem:[#allocation6 + $0x44] sm:$0xf]
    %v107 = vld [vmem:[#allocation6 + $0x48] sm:$0xf]
    %v108 = vld [vmem:[#allocation6 + $0x4c] sm:$0xf]
    %v109 = vld [vmem:[#allocation6 + $0x50] sm:$0xf]
    %v110 = vld [vmem:[#allocation6 + $0x54] sm:$0xf]
    %v111 = vld [vmem:[#allocation6 + $0x58] sm:$0xf]
    %v112 = vld [vmem:[#allocation6 + $0x5c] sm:$0xf]
    %v113 = vld [vmem:[#allocation6 + $0x60] sm:$0xf]
    %v114 = vld [vmem:[#allocation6 + $0x64] sm:$0xf]
    %v115 = vld [vmem:[#allocation6 + $0x68] sm:$0xf]
    %v116 = vld [vmem:[#allocation6 + $0x6c] sm:$0xf]
    %v117 = vld [vmem:[#allocation6 + $0x70] sm:$0xf]
    %v118 = vld [vmem:[#allocation6 + $0x74] sm:$0xf]
    %v119 = vld [vmem:[#allocation6 + $0x78] sm:$0xf]
    %v120 = vld [vmem:[#allocation6 + $0x7c] sm:$0xf]
    %v123 = vunpack.c.l.b16 %v87
    %v124 = vunpack.c.l.b16 %v88
    %v125 = vpack.c.b16 %v124, %v123
    %v159 = vunpack.c.l.b16 %v89
    %v160 = vunpack.c.l.b16 %v90
    %v161 = vunpack.c.l.b16 %v91
    %v162 = vunpack.c.l.b16 %v92
    %v163 = vunpack.c.l.b16 %v93
    %v164 = vunpack.c.l.b16 %v94
    %v165 = vunpack.c.l.b16 %v95
    %v166 = vunpack.c.l.b16 %v96
    %v167 = vunpack.c.l.b16 %v97
    %v168 = vunpack.c.l.b16 %v98
    %v169 = vunpack.c.l.b16 %v99
    %v170 = vunpack.c.l.b16 %v100
    %v171 = vunpack.c.l.b16 %v101
    %v172 = vunpack.c.l.b16 %v102
    %v173 = vunpack.c.l.b16 %v103
    %v174 = vunpack.c.l.b16 %v104
    %v175 = vunpack.c.l.b16 %v105
    %v176 = vunpack.c.l.b16 %v106
    %v177 = vunpack.c.l.b16 %v107
    %v178 = vunpack.c.l.b16 %v108
    %v179 = vunpack.c.l.b16 %v109
    %v180 = vunpack.c.l.b16 %v110
    %v181 = vunpack.c.l.b16 %v111
    %v182 = vunpack.c.l.b16 %v112
    %v183 = vunpack.c.l.b16 %v113
    %v184 = vunpack.c.l.b16 %v114
    %v185 = vunpack.c.l.b16 %v115
    %v186 = vunpack.c.l.b16 %v116
    %v187 = vunpack.c.l.b16 %v117
    %v188 = vunpack.c.l.b16 %v118
    %v189 = vunpack.c.l.b16 %v119
    %v190 = vunpack.c.l.b16 %v120
    %v191 = vpack.c.b16 %v160, %v159
    %v192 = vpack.c.b16 %v162, %v161
    %v193 = vpack.c.b16 %v164, %v163
    %v194 = vpack.c.b16 %v166, %v165
    %v195 = vpack.c.b16 %v168, %v167
    %v196 = vpack.c.b16 %v170, %v169
    %v197 = vpack.c.b16 %v172, %v171
    %v198 = vpack.c.b16 %v174, %v173
    %v199 = vpack.c.b16 %v176, %v175
    %v200 = vpack.c.b16 %v178, %v177
    %v201 = vpack.c.b16 %v180, %v179
    %v202 = vpack.c.b16 %v182, %v181
    %v203 = vpack.c.b16 %v184, %v183
    %v204 = vpack.c.b16 %v186, %v185
    %v205 = vpack.c.b16 %v188, %v187
    %v206 = vpack.c.b16 %v190, %v189
    %223 = vmatpush.bf16.xpose.msra.mxu0 %v198
    %224 = vmatpush.bf16.xpose.msra.mxu0 %v197
    %225 = vmatpush.bf16.xpose.msra.mxu0 %v196
    %226 = vmatpush.bf16.xpose.msra.mxu0 %v195
    %227 = vmatpush.bf16.xpose.msra.mxu0 %v194
    %228 = vmatpush.bf16.xpose.msra.mxu0 %v193
    %229 = vmatpush.bf16.xpose.msra.mxu0 %v192
    %230 = vmatpush.bf16.xpose.msra.mxu0 %v191
    %231 = vmatmul.bf16.gmra.mxu0 %v125
    %v232 = vpop.f32.mrf.mxu0
    %v233 = vadd.f32 0.0, %v232
    %v234 = vpop.f32.mrf.mxu0
    %v235 = vadd.f32 0.0, %v234
    %236 = vdwg.mxu0
    %237 = vmatpush.bf16.xpose.msra.mxu0 %v206
    %238 = vmatpush.bf16.xpose.msra.mxu0 %v205
    %239 = vmatpush.bf16.xpose.msra.mxu0 %v204
    %240 = vmatpush.bf16.xpose.msra.mxu0 %v203
    %241 = vmatpush.bf16.xpose.msra.mxu0 %v202
    %242 = vmatpush.bf16.xpose.msra.mxu0 %v201
    %243 = vmatpush.bf16.xpose.msra.mxu0 %v200
    %244 = vmatpush.bf16.xpose.msra.mxu0 %v199
    %245 = vmatmul.bf16.gmra.mxu0 %v125
    %v246 = vpop.f32.mrf.mxu0
    %v247 = vadd.f32 0.0, %v246
    %v248 = vpop.f32.mrf.mxu0
    %v249 = vadd.f32 0.0, %v248
    %250 = vdwg.mxu0
    %v251 = vld [vmem:[#allocation8] sm:$0xf]
    %v252 = vld [vmem:[#allocation8 + $0x4] sm:$0xf]
    %v253 = vld [vmem:[#allocation8 + $0x8] sm:$0xf]
    %v254 = vld [vmem:[#allocation8 + $0xc] sm:$0xf]
    %v255 = vld [vmem:[#allocation8 + $0x10] sm:$0xf]
    %v256 = vld [vmem:[#allocation8 + $0x14] sm:$0xf]
    %v257 = vld [vmem:[#allocation8 + $0x18] sm:$0xf]
    %v258 = vld [vmem:[#allocation8 + $0x1c] sm:$0xf]
    %v259 = vld [vmem:[#allocation8 + $0x20] sm:$0xf]
    %v260 = vld [vmem:[#allocation8 + $0x24] sm:$0xf]
    %v261 = vld [vmem:[#allocation8 + $0x28] sm:$0xf]
    %v262 = vld [vmem:[#allocation8 + $0x2c] sm:$0xf]
    %v263 = vld [vmem:[#allocation8 + $0x30] sm:$0xf]
    %v264 = vld [vmem:[#allocation8 + $0x34] sm:$0xf]
    %v265 = vld [vmem:[#allocation8 + $0x38] sm:$0xf]
    %v266 = vld [vmem:[#allocation8 + $0x3c] sm:$0xf]
    %v267 = vld [vmem:[#allocation8 + $0x40] sm:$0xf]
    %v268 = vld [vmem:[#allocation8 + $0x44] sm:$0xf]
    %v269 = vld [vmem:[#allocation8 + $0x48] sm:$0xf]
    %v270 = vld [vmem:[#allocation8 + $0x4c] sm:$0xf]
    %v271 = vld [vmem:[#allocation8 + $0x50] sm:$0xf]
    %v272 = vld [vmem:[#allocation8 + $0x54] sm:$0xf]
    %v273 = vld [vmem:[#allocation8 + $0x58] sm:$0xf]
    %v274 = vld [vmem:[#allocation8 + $0x5c] sm:$0xf]
    %v275 = vld [vmem:[#allocation8 + $0x60] sm:$0xf]
    %v276 = vld [vmem:[#allocation8 + $0x64] sm:$0xf]
    %v277 = vld [vmem:[#allocation8 + $0x68] sm:$0xf]
    %v278 = vld [vmem:[#allocation8 + $0x6c] sm:$0xf]
    %v279 = vld [vmem:[#allocation8 + $0x70] sm:$0xf]
    %v280 = vld [vmem:[#allocation8 + $0x74] sm:$0xf]
    %v281 = vld [vmem:[#allocation8 + $0x78] sm:$0xf]
    %v282 = vld [vmem:[#allocation8 + $0x7c] sm:$0xf]
    %v315 = vunpack.c.l.b16 %v251
    %v316 = vunpack.c.l.b16 %v252
    %v317 = vunpack.c.l.b16 %v253
    %v318 = vunpack.c.l.b16 %v254
    %v319 = vunpack.c.l.b16 %v255
    %v320 = vunpack.c.l.b16 %v256
    %v321 = vunpack.c.l.b16 %v257
    %v322 = vunpack.c.l.b16 %v258
    %v323 = vunpack.c.l.b16 %v259
    %v324 = vunpack.c.l.b16 %v260
    %v325 = vunpack.c.l.b16 %v261
    %v326 = vunpack.c.l.b16 %v262
    %v327 = vunpack.c.l.b16 %v263
    %v328 = vunpack.c.l.b16 %v264
    %v329 = vunpack.c.l.b16 %v265
    %v330 = vunpack.c.l.b16 %v266
    %v331 = vunpack.c.l.b16 %v267
    %v332 = vunpack.c.l.b16 %v268
    %v333 = vunpack.c.l.b16 %v269
    %v334 = vunpack.c.l.b16 %v270
    %v335 = vunpack.c.l.b16 %v271
    %v336 = vunpack.c.l.b16 %v272
    %v337 = vunpack.c.l.b16 %v273
    %v338 = vunpack.c.l.b16 %v274
    %v339 = vunpack.c.l.b16 %v275
    %v340 = vunpack.c.l.b16 %v276
    %v341 = vunpack.c.l.b16 %v277
    %v342 = vunpack.c.l.b16 %v278
    %v343 = vunpack.c.l.b16 %v279
    %v344 = vunpack.c.l.b16 %v280
    %v345 = vunpack.c.l.b16 %v281
    %v346 = vunpack.c.l.b16 %v282
    %v347 = vpack.c.b16 %v316, %v315
    %v348 = vpack.c.b16 %v318, %v317
    %v349 = vpack.c.b16 %v320, %v319
    %v350 = vpack.c.b16 %v322, %v321
    %v351 = vpack.c.b16 %v324, %v323
    %v352 = vpack.c.b16 %v326, %v325
    %v353 = vpack.c.b16 %v328, %v327
    %v354 = vpack.c.b16 %v330, %v329
    %v355 = vpack.c.b16 %v332, %v331
    %v356 = vpack.c.b16 %v334, %v333
    %v357 = vpack.c.b16 %v336, %v335
    %v358 = vpack.c.b16 %v338, %v337
    %v359 = vpack.c.b16 %v340, %v339
    %v360 = vpack.c.b16 %v342, %v341
    %v361 = vpack.c.b16 %v344, %v343
    %v362 = vpack.c.b16 %v346, %v345
    %379 = vmatpush.bf16.xpose.msra.mxu0 %v354
    %380 = vmatpush.bf16.xpose.msra.mxu0 %v353
    %381 = vmatpush.bf16.xpose.msra.mxu0 %v352
    %382 = vmatpush.bf16.xpose.msra.mxu0 %v351
    %383 = vmatpush.bf16.xpose.msra.mxu0 %v350
    %384 = vmatpush.bf16.xpose.msra.mxu0 %v349
    %385 = vmatpush.bf16.xpose.msra.mxu0 %v348
    %386 = vmatpush.bf16.xpose.msra.mxu0 %v347
    %387 = vmatmul.bf16.gmra.mxu0 %v125
    %v388 = vpop.f32.mrf.mxu0
    %v389 = vadd.f32 0.0, %v388
    %v390 = vpop.f32.mrf.mxu0
    %v391 = vadd.f32 0.0, %v390
    %392 = vdwg.mxu0
    %393 = vmatpush.bf16.xpose.msra.mxu0 %v362
    %394 = vmatpush.bf16.xpose.msra.mxu0 %v361
    %395 = vmatpush.bf16.xpose.msra.mxu0 %v360
    %396 = vmatpush.bf16.xpose.msra.mxu0 %v359
    %397 = vmatpush.bf16.xpose.msra.mxu0 %v358
    %398 = vmatpush.bf16.xpose.msra.mxu0 %v357
    %399 = vmatpush.bf16.xpose.msra.mxu0 %v356
    %400 = vmatpush.bf16.xpose.msra.mxu0 %v355
    %401 = vmatmul.bf16.gmra.mxu0 %v125
    %v402 = vpop.f32.mrf.mxu0
    %v403 = vadd.f32 0.0, %v402
    %v404 = vpop.f32.mrf.mxu0
    %v405 = vadd.f32 0.0, %v404
    %406 = vdwg.mxu0
    %v407 = vxor.u32 %v233, 2147483648
    %v408 = vxor.u32 %v247, 2147483648
    %v409 = vxor.u32 %v235, 2147483648
    %v410 = vxor.u32 %v249, 2147483648
    %v411 = vmul.f32 %v407, 1.442695
    %v412 = vpow.pop %v411
    %v413 = vmul.f32 %v408, 1.442695
    %v414 = vpow.pop %v413
    %v415 = vmul.f32 %v409, 1.442695
    %v416 = vpow.pop %v415
    %v417 = vmul.f32 %v410, 1.442695
    %v418 = vpow.pop %v417
    %v419 = vadd.f32 %v412, 1.0
    %v420 = vadd.f32 %v414, 1.0
    %v421 = vadd.f32 %v416, 1.0
    %v422 = vadd.f32 %v418, 1.0
    %v423 = vrcp.pop %v419
    %v424 = vmul.f32 %v419, %v423
    %v425 = vsub.f32 1.0, %v424
    %v426 = vmul.f32 %v423, %v425
    %v427 = vadd.f32 %v423, %v426
    %vm428 = vweird.f32 %v419
    %vm429 = vweird.f32 %v423
    %vm430 = vmor %vm428, %vm429
    %v431 = vsel %vm430, %v423, %v427
    %v432 = vand.u32 2147483647, %v419
    %vm433 = vcmp.eq.f32.partialorder %v432, 8.507059e+37
    %v434 = vand.u32 %v419, 2147483648
    %v435 = vor.u32 1.1754944e-38, %v434
    %v436 = vsel %vm433, %v435, %v431
    %v437 = vmul.f32 1.0, %v436
    %v438 = vrcp.pop %v420
    %v439 = vmul.f32 %v420, %v438
    %v440 = vsub.f32 1.0, %v439
    %v441 = vmul.f32 %v438, %v440
    %v442 = vadd.f32 %v438, %v441
    %vm443 = vweird.f32 %v420
    %vm444 = vweird.f32 %v438
    %vm445 = vmor %vm443, %vm444
    %v446 = vsel %vm445, %v438, %v442
    %v447 = vand.u32 2147483647, %v420
    %vm448 = vcmp.eq.f32.partialorder %v447, 8.507059e+37
    %v449 = vand.u32 %v420, 2147483648
    %v450 = vor.u32 1.1754944e-38, %v449
    %v451 = vsel %vm448, %v450, %v446
    %v452 = vmul.f32 1.0, %v451
    %v453 = vrcp.pop %v421
    %v454 = vmul.f32 %v421, %v453
    %v455 = vsub.f32 1.0, %v454
    %v456 = vmul.f32 %v453, %v455
    %v457 = vadd.f32 %v453, %v456
    %vm458 = vweird.f32 %v421
    %vm459 = vweird.f32 %v453
    %vm460 = vmor %vm458, %vm459
    %v461 = vsel %vm460, %v453, %v457
    %v462 = vand.u32 2147483647, %v421
    %vm463 = vcmp.eq.f32.partialorder %v462, 8.507059e+37
    %v464 = vand.u32 %v421, 2147483648
    %v465 = vor.u32 1.1754944e-38, %v464
    %v466 = vsel %vm463, %v465, %v461
    %v467 = vmul.f32 1.0, %v466
    %v468 = vrcp.pop %v422
    %v469 = vmul.f32 %v422, %v468
    %v470 = vsub.f32 1.0, %v469
    %v471 = vmul.f32 %v468, %v470
    %v472 = vadd.f32 %v468, %v471
    %vm473 = vweird.f32 %v422
    %vm474 = vweird.f32 %v468
    %vm475 = vmor %vm473, %vm474
    %v476 = vsel %vm475, %v468, %v472
    %v477 = vand.u32 2147483647, %v422
    %vm478 = vcmp.eq.f32.partialorder %v477, 8.507059e+37
    %v479 = vand.u32 %v422, 2147483648
    %v480 = vor.u32 1.1754944e-38, %v479
    %v481 = vsel %vm478, %v480, %v476
    %v482 = vmul.f32 1.0, %v481
    %v483 = vmul.f32 %v233, %v437
    %v484 = vmul.f32 %v247, %v452
    %v485 = vmul.f32 %v235, %v467
    %v486 = vmul.f32 %v249, %v482
    %v487 = vmul.f32 %v483, %v389
    %v488 = vmul.f32 %v484, %v403
    %v489 = vmul.f32 %v485, %v391
    %v490 = vmul.f32 %v486, %v405
    %v491 = vld [vmem:[#allocation2] sm:$0xff]
    %v492 = vld [vmem:[#allocation2 + $0x8] sm:$0xff]
    %v493 = vpack.c.bf16 %v489, %v487
    %v494 = vpack.c.bf16 %v490, %v488
    %v495 = vld [vmem:[#allocation9] sm:$0xff]
    %v496 = vld [vmem:[#allocation9 + $0x8] sm:$0xff]
    %v497 = vld [vmem:[#allocation9 + $0x10] sm:$0xff]
    %v498 = vld [vmem:[#allocation9 + $0x18] sm:$0xff]
    %v499 = vld [vmem:[#allocation9 + $0x20] sm:$0xff]
    %v500 = vld [vmem:[#allocation9 + $0x28] sm:$0xff]
    %v501 = vld [vmem:[#allocation9 + $0x30] sm:$0xff]
    %v502 = vld [vmem:[#allocation9 + $0x38] sm:$0xff]
    %v503 = vld [vmem:[#allocation9 + $0x40] sm:$0xff]
    %v504 = vld [vmem:[#allocation9 + $0x48] sm:$0xff]
    %v505 = vld [vmem:[#allocation9 + $0x50] sm:$0xff]
    %v506 = vld [vmem:[#allocation9 + $0x58] sm:$0xff]
    %v507 = vld [vmem:[#allocation9 + $0x60] sm:$0xff]
    %v508 = vld [vmem:[#allocation9 + $0x68] sm:$0xff]
    %v509 = vld [vmem:[#allocation9 + $0x70] sm:$0xff]
    %v510 = vld [vmem:[#allocation9 + $0x78] sm:$0xff]
    %v527 = vunpack.c.l.b16 %v495
    %v528 = vunpack.c.h.b16 %v495
    %v529 = vunpack.c.l.b16 %v496
    %v530 = vunpack.c.h.b16 %v496
    %v531 = vunpack.c.l.b16 %v497
    %v532 = vunpack.c.h.b16 %v497
    %v533 = vunpack.c.l.b16 %v498
    %v534 = vunpack.c.h.b16 %v498
    %v535 = vunpack.c.l.b16 %v499
    %v536 = vunpack.c.h.b16 %v499
    %v537 = vunpack.c.l.b16 %v500
    %v538 = vunpack.c.h.b16 %v500
    %v539 = vunpack.c.l.b16 %v501
    %v540 = vunpack.c.h.b16 %v501
    %v541 = vunpack.c.l.b16 %v502
    %v542 = vunpack.c.h.b16 %v502
    %v543 = vunpack.c.l.b16 %v503
    %v544 = vunpack.c.h.b16 %v503
    %v545 = vunpack.c.l.b16 %v504
    %v546 = vunpack.c.h.b16 %v504
    %v547 = vunpack.c.l.b16 %v505
    %v548 = vunpack.c.h.b16 %v505
    %v549 = vunpack.c.l.b16 %v506
    %v550 = vunpack.c.h.b16 %v506
    %v551 = vunpack.c.l.b16 %v507
    %v552 = vunpack.c.h.b16 %v507
    %v553 = vunpack.c.l.b16 %v508
    %v554 = vunpack.c.h.b16 %v508
    %v555 = vunpack.c.l.b16 %v509
    %v556 = vunpack.c.h.b16 %v509
    %v557 = vunpack.c.l.b16 %v510
    %v558 = vunpack.c.h.b16 %v510
    %v559 = vpack.c.b16 %v529, %v527
    %v560 = vpack.c.b16 %v530, %v528
    %v561 = vpack.c.b16 %v533, %v531
    %v562 = vpack.c.b16 %v534, %v532
    %v563 = vpack.c.b16 %v537, %v535
    %v564 = vpack.c.b16 %v538, %v536
    %v565 = vpack.c.b16 %v541, %v539
    %v566 = vpack.c.b16 %v542, %v540
    %v567 = vpack.c.b16 %v545, %v543
    %v568 = vpack.c.b16 %v546, %v544
    %v569 = vpack.c.b16 %v549, %v547
    %v570 = vpack.c.b16 %v550, %v548
    %v571 = vpack.c.b16 %v553, %v551
    %v572 = vpack.c.b16 %v554, %v552
    %v573 = vpack.c.b16 %v557, %v555
    %v574 = vpack.c.b16 %v558, %v556
    %591 = vmatpush.bf16.xpose.msra.mxu0 %v573
    %592 = vmatpush.bf16.xpose.msra.mxu0 %v571
    %593 = vmatpush.bf16.xpose.msra.mxu0 %v569
    %594 = vmatpush.bf16.xpose.msra.mxu0 %v567
    %595 = vmatpush.bf16.xpose.msra.mxu0 %v565
    %596 = vmatpush.bf16.xpose.msra.mxu0 %v563
    %597 = vmatpush.bf16.xpose.msra.mxu0 %v561
    %598 = vmatpush.bf16.xpose.msra.mxu0 %v559
    %599 = vmatmul.bf16.gmra.mxu0 %v493
    %v600 = vpop.f32.mrf.mxu0
    %v601 = vadd.f32 0.0, %v600
    %v602 = vpop.f32.mrf.mxu0
    %v603 = vadd.f32 0.0, %v602
    %604 = vdwg.mxu0
    %605 = vmatpush.bf16.xpose.msra.mxu0 %v574
    %606 = vmatpush.bf16.xpose.msra.mxu0 %v572
    %607 = vmatpush.bf16.xpose.msra.mxu0 %v570
    %608 = vmatpush.bf16.xpose.msra.mxu0 %v568
    %609 = vmatpush.bf16.xpose.msra.mxu0 %v566
    %610 = vmatpush.bf16.xpose.msra.mxu0 %v564
    %611 = vmatpush.bf16.xpose.msra.mxu0 %v562
    %612 = vmatpush.bf16.xpose.msra.mxu0 %v560
    %613 = vmatmul.bf16.gmra.mxu0 %v494
    %v614 = vpop.f32.mrf.mxu0
    %v615 = vadd.f32 %v601, %v614
    %v616 = vpop.f32.mrf.mxu0
    %v617 = vadd.f32 %v603, %v616
    %618 = vdwg.mxu0
    %v619 = vadd.f32 %v491, %v615
    %v620 = vadd.f32 %v492, %v617
    %621 = vst [vmem:[#allocation2] sm:$0xff] %v619
    %622 = vst [vmem:[#allocation2 + $0x8] sm:$0xff] %v620
    // Predicated region
    $region38: #{tpu_custom_call.1} parent=1 // pred_check
      %p623 = pneg %p81
    $region39: #{tpu_custom_call.1} parent=1 // pred_check_branch
      %625 = sbr.rel (%p623) target = $region41
    $region40: #{tpu_custom_call.1} parent=1 // pred_region
      %v626 = vld [vmem:[#allocation2] sm:$0xff]
      %v627 = vld [vmem:[#allocation2 + $0x8] sm:$0xff]
      %628 = vst [vmem:[#allocation11] sm:$0xff] %v626
      %629 = vst [vmem:[#allocation11 + $0x8] sm:$0xff] %v627
    $region41: #{tpu_custom_call.1} parent=1 // pred_fallthru
      _
    // Predicated region
    $region42: #{tpu_custom_call.1} parent=1 // pred_check
      _
    $region43: #{tpu_custom_call.1} parent=1 // pred_check_branch
      %631 = sbr.rel (0) target = $region45
    $region44: #{tpu_custom_call.1} parent=1 // pred_region
      %633 = vsyncadd [#allocation5], 0
      %s634 = sshll.u32 [#allocation11], 4
      %s635 = int_to_ptr.vmem [resolvable:$true] %s634
      %s636 = sshll.u32 %s4, 4
      %s637 = int_to_ptr.hbm [resolvable:$true] %s636
      %642 = dma.vmem_to_hbm [thread:$0]  %s635, 256, %s637, [#allocation5], 128, 128, 8
    $region45: #{tpu_custom_call.1} parent=1 // pred_fallthru
      _
    // Predicated region
    $region46: #{tpu_custom_call.1} parent=1 // pred_check
      _
    $region47: #{tpu_custom_call.1} parent=1 // pred_check_branch
      %644 = sbr.rel (0) target = $region49
    $region48: #{tpu_custom_call.1} parent=1 // pred_region
      %646 = dma.done [#allocation5], 256
    $region49: #{tpu_custom_call.1} parent=1 // pred_fallthru
      _
    %647 = vsyncpa [#allocation4], 1
    %648 = vsyncpa [#allocation7], 1
    %649 = vsyncpa [#allocation10], 1
    %650 = vsyncpa [#allocation5], 1

</llo_original>
